<compile_context>
chip_gen: v6e
topology: v6e:2x2x1
jax: 0.10.0
libtpu: 0.0.40
codegen_flags: <defaults>
</compile_context>

<pallas_src>
import functools

import jax
import jax.numpy as jnp
from jax import lax
from jax.experimental import pallas as pl
from jax.experimental.pallas import tpu as pltpu


_INV_SQRT2 = 0.7071067811865476
_VMEM_BUDGET_BYTES = 12 * 1024 * 1024   # conservative: default scoped VMEM is 16 MiB on v5e


def _gelu_exact_f32(y):
    # PyTorch nn.GELU() default = exact erf formulation (EUP transcendental, f32).
    return 0.5 * y * (1.0 + lax.erf(y * _INV_SQRT2))


# ----------------------------- kernels -------------------------------------------------


def _read_proj_resident_kernel(patch_ref, wp_ref, r_ref, o_ref, *, compute_dtype):
    """Weight-resident path: grid (B, row_tiles); Wp stays in VMEM (constant index_map).

    patch_ref : (1, TM, D)   patch tokens in original dtype (cast in-register before the dot)
    wp_ref    : (D, DOUT)    patch half of the split Linear weight (compute dtype, resident)
    r_ref     : (1, 1, DOUT) f32 precomputed readout row: cls @ Wr + bias
    o_ref     : (1, TM, DOUT)
    """
    xt = patch_ref[0].astype(compute_dtype)
    y = jnp.dot(xt, wp_ref[...], preferred_element_type=jnp.float32) + r_ref[0]
    o_ref[0] = _gelu_exact_f32(y).astype(o_ref.dtype)


def _read_proj_ktiled_kernel(patch_ref, wp_ref, r_ref, o_ref, acc_ref, *, compute_dtype):
    """Fallback for very large D: grid (B, row_tiles, k_tiles) with f32 VMEM accumulator."""
    k = pl.program_id(2)

    @pl.when(k == 0)
    def _init():
        acc_ref[...] = jnp.zeros_like(acc_ref)

    xt = patch_ref[0].astype(compute_dtype)
    acc_ref[...] += jnp.dot(xt, wp_ref[...], preferred_element_type=jnp.float32)

    @pl.when(k == pl.num_programs(2) - 1)
    def _flush():
        o_ref[0] = _gelu_exact_f32(acc_ref[...] + r_ref[0]).astype(o_ref.dtype)


# ----------------------------- tiling helpers ------------------------------------------


def _pick_tile(dim, cap, align):
    """Largest multiple-of-`align` divisor of `dim` that is <= cap; else the full dim."""
    if dim <= cap:
        return dim
    t = (cap // align) * align
    while t >= align:
        if dim % t == 0:
            return t
        t -= align
    # TODO(synk): no aligned divisor <= cap (e.g. prime dim) -> falls back to the full
    # dimension; a padding path would bound VMEM in that corner case.
    return dim


# ----------------------------- public API -----------------------------------------------


def make_read_projection(w, b, *, start_index=1, compute_dtype=jnp.bfloat16,
                         out_dtype=None, tm_cap=512, tk_cap=512):
    """Pack weights once; return a jitted fused forward  x:(B,S,D) -> (B, S-start_index, D).

    w : (D, 2D) nn.Linear weight,  b : (D,) bias.
    """
    d_out, d_in2 = w.shape
    D = d_out
    assert d_in2 == 2 * D, (w.shape,)

    # Split-weight formulation, packed ONCE (not per call):
    #   concat([patch, readout]) @ W^T == patch @ Wp + readout @ Wr
    wt = jnp.transpose(jnp.asarray(w))
    wp = jnp.asarray(wt[:D], compute_dtype)             # (D, D) multiplies the patch tokens
    wr = jnp.asarray(wt[D:], compute_dtype)             # (D, D) multiplies the broadcast cls row
    bias = jnp.asarray(b, jnp.float32).reshape(1, 1, D)

    def fwd(x):
        B, S, d_in = x.shape
        assert d_in == D, (x.shape, D)
        N = S - start_index
        odtype = out_dtype or x.dtype

        patch = x[:, start_index:, :]                          # (B, N, D), original dtype
        cls = x[:, 0:1, :].astype(compute_dtype)               # (B, 1, D)
        # Readout term hoisted out of the kernel: one tiny matmul per batch row.
        r = jnp.einsum("bod,df->bof", cls, wr,
                       preferred_element_type=jnp.float32) + bias   # (B, 1, D) f32

        tm = _pick_tile(N, tm_cap, 8)
        x_bytes = jnp.dtype(x.dtype).itemsize
        o_bytes = jnp.dtype(odtype).itemsize
        c_bytes = jnp.dtype(compute_dtype).itemsize
        est_resident = (2 * D * D * c_bytes          # Wp (worst case: double-buffered)
                        + 2 * tm * D * x_bytes       # patch tile (double-buffered)
                        + 2 * tm * D * o_bytes       # output tile (double-buffered)
                        + 2 * D * 4)                 # readout row

        if est_resident <= _VMEM_BUDGET_BYTES:
            # Weight-resident path: no K grid axis, no accumulator scratch.
            return pl.pallas_call(
                functools.partial(_read_proj_resident_kernel, compute_dtype=compute_dtype),
                grid=(B, N // tm),
                in_specs=[
                    pl.BlockSpec((1, tm, D), lambda bb, i: (bb, i, 0)),   # patch tokens
                    pl.BlockSpec((D, D), lambda bb, i: (0, 0)),           # Wp (stays resident)
                    pl.BlockSpec((1, 1, D), lambda bb, i: (bb, 0, 0)),    # readout row
                ],
                out_specs=pl.BlockSpec((1, tm, D), lambda bb, i: (bb, i, 0)),
                out_shape=jax.ShapeDtypeStruct((B, N, D), odtype),
                compiler_params=pltpu.CompilerParams(
                    dimension_semantics=("parallel", "parallel")),
            )(patch, wp, r)

        # Fallback for very large D (weight does not fit VMEM): K-tiled reduction,
        # reduction axis last and marked "arbitrary".
        tk = _pick_tile(D, tk_cap, 128)
        tm_s = _pick_tile(N, 256, 8)
        return pl.pallas_call(
            functools.partial(_read_proj_ktiled_kernel, compute_dtype=compute_dtype),
            grid=(B, N // tm_s, D // tk),
            in_specs=[
                pl.BlockSpec((1, tm_s, tk), lambda bb, i, k: (bb, i, k)),  # patch tokens
                pl.BlockSpec((tk, D), lambda bb, i, k: (k, 0)),            # Wp slab
                pl.BlockSpec((1, 1, D), lambda bb, i, k: (bb, 0, 0)),      # readout row
            ],
            out_specs=pl.BlockSpec((1, tm_s, D), lambda bb, i, k: (bb, i, 0)),
            out_shape=jax.ShapeDtypeStruct((B, N, D), odtype),
            scratch_shapes=[pltpu.VMEM((tm_s, D), jnp.float32)],
            compiler_params=pltpu.CompilerParams(
                dimension_semantics=("parallel", "parallel", "arbitrary")),
        )(patch, wp, r)

    return jax.jit(fwd)


def read_projection_ref(x, w, b, *, start_index=1, compute_dtype=jnp.bfloat16):
    """Plain-JAX reference following the PyTorch forward literally (concat form)."""
    patch = x[:, start_index:, :]
    readout = jnp.broadcast_to(x[:, :1, :], patch.shape)
    feats = jnp.concatenate([patch, readout], axis=-1)
    pre = jnp.dot(feats.astype(compute_dtype), jnp.transpose(w).astype(compute_dtype),
                  preferred_element_type=jnp.float32) + b.astype(jnp.float32)
    return _gelu_exact_f32(pre)


if __name__ == "__main__":
    key = jax.random.PRNGKey(0)
    k1, k2, k3, k4, k5, k6 = jax.random.split(key, 6)

    # --- small config (toy sizes implied by the module) -----------------------------
    B, S, D = 2, 8, 32
    x = jax.random.normal(k1, (B, S, D), jnp.float32)
    w = jax.random.normal(k2, (D, 2 * D), jnp.float32) * (2.0 * D) ** -0.5
    b = jax.random.normal(k3, (D,), jnp.float32) * 0.02

    fwd = make_read_projection(w, b)
    out = jax.block_until_ready(fwd(x))
    ref = read_projection_ref(x, w, b)
    assert out.shape == (B, S - 1, D), out.shape
    assert bool(jnp.all(jnp.isfinite(out)))
    err = float(jnp.max(jnp.abs(out - ref)))
    assert err < 1e-2, f"small-config mismatch: {err}"

    # --- ViT-L/16-384-like config: exercises the weight-resident tiled grid ----------
    B2, S2, D2 = 2, 577, 1024            # 24x24 patch tokens + cls token, emb 1024
    x2 = jax.random.normal(k4, (B2, S2, D2), jnp.float32)
    w2 = jax.random.normal(k5, (D2, 2 * D2), jnp.float32) * (2.0 * D2) ** -0.5
    b2 = jax.random.normal(k6, (D2,), jnp.float32) * 0.02

    fwd2 = make_read_projection(w2, b2)
    out2 = jax.block_until_ready(fwd2(x2))
    ref2 = read_projection_ref(x2, w2, b2)
    assert out2.shape == (B2, S2 - 1, D2), out2.shape
    assert bool(jnp.all(jnp.isfinite(out2)))
    err2 = float(jnp.max(jnp.abs(out2 - ref2)))
    assert err2 < 2e-2, f"ViT-L-config mismatch: {err2}"

    print("KERNEL_OK")
</pallas_src>

<mosaic_0001>
module attributes {stable_mosaic.version = 11 : i64} {
  func.func @_read_proj_resident_kernel(%arg0: i32, %arg1: i32, %arg2: memref<1x7x32xf32, #tpu.memory_space<vmem>>, %arg3: memref<32x32xbf16, #tpu.memory_space<vmem>>, %arg4: memref<1x1x32xf32, #tpu.memory_space<vmem>>, %arg5: memref<1x7x32xf32, #tpu.memory_space<vmem>>) attributes {dimension_semantics = [#tpu.dimension_semantics<parallel>, #tpu.dimension_semantics<parallel>], iteration_bounds = array<i64: 2, 1>, scalar_prefetch = 0 : i64, scratch_operands = 0 : i64, tpu.core_type = #tpu.core_type<tc>, window_params = [{transform_indices = @transform_0, window_bounds = array<i64: 1, 7, 32>}, {pipeline_mode = #tpu.pipeline_mode<synchronous>, transform_indices = @transform_1, window_bounds = array<i64: 32, 32>}, {transform_indices = @transform_2, window_bounds = array<i64: 1, 1, 32>}, {transform_indices = @transform_3, window_bounds = array<i64: 1, 7, 32>}]} {
    %c0 = arith.constant 0 : index
    %c0_0 = arith.constant 0 : index
    %c0_1 = arith.constant 0 : index
    %0 = vector.load %arg2[%c0, %c0_0, %c0_1] : memref<1x7x32xf32, #tpu.memory_space<vmem>>, vector<1x7x32xf32>
    %1 = vector.shape_cast %0 : vector<1x7x32xf32> to vector<7x32xf32>
    %2 = arith.truncf %1 : vector<7x32xf32> to vector<7x32xbf16>
    %c0_2 = arith.constant 0 : index
    %c0_3 = arith.constant 0 : index
    %3 = vector.load %arg3[%c0_2, %c0_3] : memref<32x32xbf16, #tpu.memory_space<vmem>>, vector<32x32xbf16>
    %cst = arith.constant dense<0.000000e+00> : vector<7x32xf32>
    %4 = tpu.matmul %2, %3, %cst {dimension_numbers = #tpu.dot_dimension_numbers<[1], [0], [0], [1], [0, 0, 1, 1], [], []>} : vector<7x32xbf16>, vector<32x32xbf16>, vector<7x32xf32> -> vector<7x32xf32>
    %c0_4 = arith.constant 0 : index
    %c0_5 = arith.constant 0 : index
    %c0_6 = arith.constant 0 : index
    %5 = vector.load %arg4[%c0_4, %c0_5, %c0_6] : memref<1x1x32xf32, #tpu.memory_space<vmem>>, vector<1x1x32xf32>
    %6 = vector.shape_cast %5 : vector<1x1x32xf32> to vector<1x32xf32>
    %7 = vector.broadcast %6 : vector<1x32xf32> to vector<7x32xf32>
    %8 = arith.addf %4, %7 : vector<7x32xf32>
    %cst_7 = arith.constant 5.000000e-01 : f32
    %9 = vector.broadcast %cst_7 : f32 to vector<7x32xf32>
    %10 = arith.mulf %9, %8 : vector<7x32xf32>
    %cst_8 = arith.constant 0.707106769 : f32
    %11 = vector.broadcast %cst_8 : f32 to vector<7x32xf32>
    %12 = arith.mulf %8, %11 : vector<7x32xf32>
    %13 = math.erf %12 : vector<7x32xf32>
    %cst_9 = arith.constant 1.000000e+00 : f32
    %14 = vector.broadcast %cst_9 : f32 to vector<7x32xf32>
    %15 = arith.addf %14, %13 : vector<7x32xf32>
    %16 = arith.mulf %10, %15 : vector<7x32xf32>
    %c0_10 = arith.constant 0 : index
    %c0_11 = arith.constant 0 : index
    %c0_12 = arith.constant 0 : index
    %17 = vector.load %arg5[%c0_10, %c0_11, %c0_12] : memref<1x7x32xf32, #tpu.memory_space<vmem>>, vector<1x7x32xf32>
    %18 = vector.shape_cast %17 : vector<1x7x32xf32> to vector<7x32xf32>
    %19 = vector.shape_cast %16 : vector<7x32xf32> to vector<1x7x32xf32>
    tpu.vector_store %arg5[%c0_10, %c0_11, %c0_12], %19 {strides = array<i32>} : memref<1x7x32xf32, #tpu.memory_space<vmem>>, vector<1x7x32xf32>,
    return
  }
  func.func @transform_0(%arg0: i32, %arg1: i32) -> (i32, i32, i32) {
    %c0_i32 = arith.constant 0 : i32
    %c0_i32_0 = arith.constant 0 : i32
    return %arg0, %arg1, %c0_i32 : i32, i32, i32
  }
  func.func @transform_1(%arg0: i32, %arg1: i32) -> (i32, i32) {
    %c0_i32 = arith.constant 0 : i32
    %c0_i32_0 = arith.constant 0 : i32
    %c0_i32_1 = arith.constant 0 : i32
    return %c0_i32, %c0_i32_0 : i32, i32
  }
  func.func @transform_2(%arg0: i32, %arg1: i32) -> (i32, i32, i32) {
    %c0_i32 = arith.constant 0 : i32
    %c0_i32_0 = arith.constant 0 : i32
    %c0_i32_1 = arith.constant 0 : i32
    return %arg0, %c0_i32, %c0_i32_0 : i32, i32, i32
  }
  func.func @transform_3(%arg0: i32, %arg1: i32) -> (i32, i32, i32) {
    %c0_i32 = arith.constant 0 : i32
    %c0_i32_0 = arith.constant 0 : i32
    return %arg0, %arg1, %c0_i32 : i32, i32, i32
  }
}

</mosaic_0001>

<llo_original>
// kernel: fwd.1
$region0: #{fwd.1}
  #allocation0 [shape = 'u32[]', space=smem, size = 0x4, offset = 0x4, fixed_abs, tag = 'smem constant byte address 0x4 - core index']
  #allocation1 [shape = 'u32[144,128]{1,0:T(1,128)}', space=vmem, size = 0x12000, scoped, tag = 'internal scratch']
  %s0 = inlined_call_operand.vmem [shape: f32[2,7,32], index: 0, kind: input, shape index: {}]
  %s1 = inlined_call_operand.vmem [shape: bf16[32,32], index: 1, kind: input, shape index: {}]
  %s2 = inlined_call_operand.vmem [shape: f32[2,1,32], index: 2, kind: input, shape index: {}]
  %s3 = inlined_call_operand.vmem [shape: f32[2,7,32], index: 3, kind: output, shape index: {}]
  %s4 = sld [smem:[#allocation0]]
  $region45: #{fwd.1} parent=0
    _
  %s6 = ssub.s32 1, %s4
  %s7 = scalar_select 0, %s6, %s4
  loop: start=0, step=1, limit=4
  $region2: #{fwd.1} parent=0 // loop_pre_header
    _
  $region3: #{fwd.1} parent=0 // loop_header
    %s9 = sphi 0, %s13
    %p10 = scmp.ge.s32.totalorder %s9, 4
    %s16 = sphi 0, %s28
    %s17 = sphi 0, %s24
    %s18 = sphi 0, %s16
    %s19 = sphi 0, %s17
    %s20 = sphi 0, %s18
    %s21 = sphi 0, %s19
    %s33 = sphi 0, %s35
    %s36 = sphi 0, %s33
    %s37 = sphi 0, %s36
    %s53 = sphi 0, %s37
    %s57 = sphi 0, %s57
    %s59 = sphi 0, %s57
    %s60 = sphi 0, %s59
    %s74 = sphi 0, %s60
    %s80 = sphi 0, %s82
    %s83 = sphi 0, %s80
    %s84 = sphi 0, %s83
    %s100 = sphi 0, %s84
    %s108 = sphi 0, %s110
    %s111 = sphi 0, %s108
    %s112 = sphi 0, %s111
    %s128 = sphi 0, %s112
  $region4: #{fwd.1} parent=0 // loop_header_branch
    %12 = sbr.rel (%p10) target = $region8
  $region5: #{fwd.1} parent=0 // loop_body
    %s14 = ssub.s32 %s9, 1
    %s15 = ssub.s32 %s9, 2
    %s22 = sadd.s32 1, %s17
    %p23 = scmp.ge.s32.totalorder %s22, 1
    %s24 = scalar_select %p23, 0, %s22
    %s25 = sadd.s32 1, %s16
    %s26 = scalar_select %p23, %s25, %s16
    %p27 = scmp.ge.s32.totalorder %s26, 2
    %s28 = scalar_select %p27, 0, %s26
    %s29 = ssub.s32 %s16, %s28
    %s30 = ssub.s32 %s17, %s24
    %s31 = sor.u32 %s29, %s30
    %p32 = scmp.eq.s32.totalorder %s31, 0
    %s34 = sadd.s32 %s33, 1
    %s35 = scalar_select %p32, %s33, %s34
    %p38 = pneg %p32
    %p39 = scmp.eq.s32.totalorder %s9, 1
    %p40 = por %p38, %p39
    %p41 = scmp.ne.s32.totalorder %s33, %s36
    %p42 = scmp.eq.s32.totalorder %s9, 0
    %p43 = por %p41, %p42
    %p44 = scmp.ne.s32.totalorder %s33, %s36
    %p45 = scmp.eq.s32.totalorder %s14, 1
    %p46 = por %p44, %p45
    %p47 = scmp.ne.s32.totalorder %s36, %s37
    %p48 = scmp.eq.s32.totalorder %s14, 0
    %p49 = por %p47, %p48
    %p50 = scmp.ne.s32.totalorder %s36, %s37
    %p51 = scmp.eq.s32.totalorder %s15, 1
    %p52 = por %p50, %p51
    %p54 = scmp.ne.s32.totalorder %s37, %s53
    %p55 = scmp.eq.s32.totalorder %s15, 0
    %p56 = por %p54, %p55
    %s58 = sadd.s32 %s57, 1
    %p61 = scmp.eq.s32.totalorder %s9, 1
    %p62 = scmp.ne.s32.totalorder %s57, %s59
    %p63 = scmp.eq.s32.totalorder %s9, 0
    %p64 = por %p62, %p63
    %p65 = scmp.ne.s32.totalorder %s57, %s59
    %p66 = scmp.eq.s32.totalorder %s14, 1
    %p67 = por %p65, %p66
    %p68 = scmp.ne.s32.totalorder %s59, %s60
    %p69 = scmp.eq.s32.totalorder %s14, 0
    %p70 = por %p68, %p69
    %p71 = scmp.ne.s32.totalorder %s59, %s60
    %p72 = scmp.eq.s32.totalorder %s15, 1
    %p73 = por %p71, %p72
    %p75 = scmp.ne.s32.totalorder %s60, %s74
    %p76 = scmp.eq.s32.totalorder %s15, 0
    %p77 = por %p75, %p76
    %s78 = ssub.s32 %s16, %s28
    %p79 = scmp.eq.s32.totalorder %s78, 0
    %s81 = sadd.s32 %s80, 1
    %s82 = scalar_select %p79, %s80, %s81
    %p85 = pneg %p79
    %p86 = scmp.eq.s32.totalorder %s9, 1
    %p87 = por %p85, %p86
    %p88 = scmp.ne.s32.totalorder %s80, %s83
    %p89 = scmp.eq.s32.totalorder %s9, 0
    %p90 = por %p88, %p89
    %p91 = scmp.ne.s32.totalorder %s80, %s83
    %p92 = scmp.eq.s32.totalorder %s14, 1
    %p93 = por %p91, %p92
    %p94 = scmp.ne.s32.totalorder %s83, %s84
    %p95 = scmp.eq.s32.totalorder %s14, 0
    %p96 = por %p94, %p95
    %p97 = scmp.ne.s32.totalorder %s83, %s84
    %p98 = scmp.eq.s32.totalorder %s15, 1
    %p99 = por %p97, %p98
    %p101 = scmp.ne.s32.totalorder %s84, %s100
    %p102 = scmp.eq.s32.totalorder %s15, 0
    %p103 = por %p101, %p102
    %s104 = ssub.s32 %s16, %s28
    %s105 = ssub.s32 %s17, %s24
    %s106 = sor.u32 %s104, %s105
    %p107 = scmp.eq.s32.totalorder %s106, 0
    %s109 = sadd.s32 %s108, 1
    %s110 = scalar_select %p107, %s108, %s109
    %p113 = pneg %p107
    %p114 = scmp.eq.s32.totalorder %s9, 1
    %p115 = por %p113, %p114
    %p116 = scmp.ne.s32.totalorder %s108, %s111
    %p117 = scmp.eq.s32.totalorder %s9, 0
    %p118 = por %p116, %p117
    %p119 = scmp.ne.s32.totalorder %s108, %s111
    %p120 = scmp.eq.s32.totalorder %s14, 1
    %p121 = por %p119, %p120
    %p122 = scmp.ne.s32.totalorder %s111, %s112
    %p123 = scmp.eq.s32.totalorder %s14, 0
    %p124 = por %p122, %p123
    %p125 = scmp.ne.s32.totalorder %s111, %s112
    %p126 = scmp.eq.s32.totalorder %s15, 1
    %p127 = por %p125, %p126
    %p129 = scmp.ne.s32.totalorder %s112, %s128
    %p130 = scmp.eq.s32.totalorder %s15, 0
    %p131 = por %p129, %p130
    %p132 = scmp.le.s32.totalorder 1, %s9
    %p133 = scmp.lt.s32.totalorder %s9, 3
    %p134 = pnand %p132, %p133
    %p135 = pneg %p134
    // Predicated region
    $region9: #{fwd.1} parent=5 // pred_check
      _
    $region10: #{fwd.1} parent=5 // pred_check_branch
      %137 = sbr.rel (%p134) target = $region12
    $region11: #{fwd.1} parent=5 // pred_region
      %s138 = ssub.s32 %s9, 1
      // Predicated region
      $region13: #{fwd.1} parent=11 // pred_check
        %p139 = pneg %p70
      $region14: #{fwd.1} parent=11 // pred_check_branch
        %141 = sbr.rel (%p139) target = $region16
      $region15: #{fwd.1} parent=11 // pred_region
        _
      $region16: #{fwd.1} parent=11 // pred_fallthru
        _
    $region12: #{fwd.1} parent=5 // pred_fallthru
      _
    %p142 = scmp.lt.s32.totalorder %s9, 2
    // Predicated region
    $region17: #{fwd.1} parent=5 // pred_check
      %p143 = pneg %p142
    $region18: #{fwd.1} parent=5 // pred_check_branch
      %145 = sbr.rel (%p143) target = $region20
    $region19: #{fwd.1} parent=5 // pred_region
      // Predicated region
      $region21: #{fwd.1} parent=19 // pred_check
        %p146 = pneg %p43
      $region22: #{fwd.1} parent=19 // pred_check_branch
        %148 = sbr.rel (%p146) target = $region24
      $region23: #{fwd.1} parent=19 // pred_region
        %p149 = scmp.lt.s32.totalorder %s16, 1
        %s150 = scalar_select %p149, %s16, 1
        %p151 = scmp.lt.s32.totalorder %s17, 0
        %s152 = scalar_select %p151, %s17, 0
        %s153 = sadd.s32 %s152, %s150
        %s154 = smul.addr %s153, 8
        %s155 = scalar_lea.vmem %s0, %s154
      $region24: #{fwd.1} parent=19 // pred_fallthru
        _
      // Predicated region
      $region25: #{fwd.1} parent=19 // pred_check
        %p156 = pneg %p90
      $region26: #{fwd.1} parent=19 // pred_check_branch
        %158 = sbr.rel (%p156) target = $region28
      $region27: #{fwd.1} parent=19 // pred_region
        %p159 = scmp.lt.s32.totalorder %s16, 1
        %s160 = scalar_select %p159, %s16, 1
        %s161 = scalar_lea.vmem %s2, %s160
      $region28: #{fwd.1} parent=19 // pred_fallthru
        _
    $region20: #{fwd.1} parent=5 // pred_fallthru
      _
    %p162 = scmp.le.s32.totalorder 1, %s9
    %p163 = scmp.lt.s32.totalorder %s9, 3
    %p164 = pnand %p162, %p163
    %p165 = pneg %p164
    // Predicated region
    $region29: #{fwd.1} parent=5 // pred_check
      _
    $region30: #{fwd.1} parent=5 // pred_check_branch
      %167 = sbr.rel (%p164) target = $region32
    $region31: #{fwd.1} parent=5 // pred_region
      %s168 = ssub.s32 %s9, 1
      %p169 = scmp.lt.s32.totalorder %s18, 1
      %s170 = scalar_select %p169, %s18, 1
      %p171 = scmp.lt.s32.totalorder %s19, 0
      %s172 = scalar_select %p171, %s19, 0
      %s173 = sadd.s32 %s172, %s170
      %s174 = smul.addr %s173, 8
      %s175 = scalar_lea.vmem %s0, %s174
      %p176 = pneg %p49
      %p177 = pneg %p46
      %p178 = pneg %p70
      %p179 = pneg %p67
      %p180 = scmp.lt.s32.totalorder %s18, 1
      %s181 = scalar_select %p180, %s18, 1
      %s182 = scalar_lea.vmem %s2, %s181
      %p183 = pneg %p96
      %p184 = pneg %p93
      %p185 = pneg %p124
      %p186 = pneg %p121
      %p187 = scmp.lt.s32.totalorder %s18, 1
      %s188 = scalar_select %p187, %s18, 1
      %p189 = scmp.lt.s32.totalorder %s19, 0
      %s190 = scalar_select %p189, %s19, 0
      %s191 = sadd.s32 %s190, %s188
      %s192 = smul.addr %s191, 8
      %s193 = scalar_lea.vmem %s3, %s192
      %p194 = scmp.lt.s32.totalorder %s18, 1
      %s195 = scalar_select %p194, %s18, 1
      %p196 = scmp.lt.s32.totalorder %s19, 0
      %s197 = scalar_select %p196, %s19, 0
      %s198 = sadd.s32 %s197, %s195
      %s199 = smul.addr %s198, 8
      %s200 = scalar_lea.vmem %s0, %s199
      %p201 = scmp.lt.s32.totalorder %s18, 1
      %s202 = scalar_select %p201, %s18, 1
      %s203 = scalar_lea.vmem %s2, %s202
      %p204 = scmp.lt.s32.totalorder %s18, 1
      %s205 = scalar_select %p204, %s18, 1
      %p206 = scmp.lt.s32.totalorder %s19, 0
      %s207 = scalar_select %p206, %s19, 0
      %s208 = sadd.s32 %s207, %s205
      %s209 = smul.addr %s208, 8
      %s210 = scalar_lea.vmem %s3, %s209
      %v212 = vld [vmem:[%s200] sm:$0x7f]
      %v213 = vpack.c.bf16 %v212, %v212
      %v214 = vld [vmem:[%s1] sm:$0xf]
      %v215 = vld [vmem:[%s1 + $0x4] sm:$0xf]
      %v216 = vld [vmem:[%s1 + $0x8] sm:$0xf]
      %v217 = vld [vmem:[%s1 + $0xc] sm:$0xf]
      %v218 = vld [vmem:[%s203] sm:$0x1]
      %v220 = vlaneseq
      %v221 = vshrl.u32 %v220, 7
      %v222 = vsub.s32 0, %v221
      %v223 = vrot.slane %v218, %v222
      %v229 = vunpack.c.l.b16 %v214
      %v230 = vunpack.c.l.b16 %v215
      %v231 = vunpack.c.l.b16 %v216
      %v232 = vunpack.c.l.b16 %v217
      %v233 = vpack.c.b16 %v230, %v229
      %v234 = vpack.c.b16 %v232, %v231
      %vm237 = vcmask 261120
      %v239 = vsel %vm237, %v213, 0
      %241 = vmatprep.subr.bf16.mxu0 0
      %242 = vmatpush1.bf16.msra.mxu0 0
      %243 = vmatprep.subr.bf16.mxu0 0
      %244 = vmatpush1.bf16.msra.mxu0 0
      %245 = vmatprep.subr.bf16.mxu0 0
      %246 = vmatpush1.bf16.msra.mxu0 0
      %247 = vmatprep.subr.bf16.mxu0 0
      %248 = vmatpush1.bf16.msra.mxu0 0
      %249 = vmatprep.subr.bf16.mxu0 0
      %250 = vmatpush1.bf16.msra.mxu0 0
      %251 = vmatprep.subr.bf16.mxu0 0
      %252 = vmatpush1.bf16.msra.mxu0 0
      %253 = vmatprep.subr.bf16.mxu0 0
      %254 = vmatpush1.bf16.msra.mxu0 %v234
      %255 = vmatprep.subr.bf16.mxu0 0
      %256 = vmatpush1.bf16.msra.mxu0 %v233
      %257 = vmatprep.subr.bf16.mxu0 0
      %258 = vmatpush2.bf16.msra.mxu0 0
      %259 = vmatprep.subr.bf16.mxu0 0
      %260 = vmatpush2.bf16.msra.mxu0 0
      %261 = vmatprep.subr.bf16.mxu0 0
      %262 = vmatpush2.bf16.msra.mxu0 0
      %263 = vmatprep.subr.bf16.mxu0 0
      %264 = vmatpush2.bf16.msra.mxu0 0
      %265 = vmatprep.subr.bf16.mxu0 0
      %266 = vmatpush2.bf16.msra.mxu0 0
      %267 = vmatprep.subr.bf16.mxu0 0
      %268 = vmatpush2.bf16.msra.mxu0 0
      %269 = vmatprep.subr.bf16.mxu0 0
      %270 = vmatpush2.bf16.msra.mxu0 0
      %271 = vmatprep.subr.bf16.mxu0 0
      %272 = vmatpush2.bf16.msra.mxu0 0
      %273 = vmatprep.mubr.bf16.mxu0 0
      %274 = vmatmul.mubr.bf16.gmra.mxu0 %v239
      %v275 = vpop.f32.mrf.mxu0
      %v276 = vadd.f32 %v223, %v275
      %v277 = vpop.f32.mrf.mxu0
      %v278 = vpop.f32.mrf.mxu0
      %v279 = vpop.f32.mrf.mxu0
      %280 = vdwg.mxu0
      %v281 = vmul.f32 %v276, 0.5
      %v282 = vmul.f32 %v276, 0.70710677
      %v283 = verf.f32.pop %v282
      %v284 = vadd.f32 %v283, 1.0
      %v285 = vmul.f32 %v281, %v284
      %vm286 = vcmask 260096
      %287 = vst.msk [vmem:[%s210] sm:$0x7f] %vm286, %v285
      %p288 = scmp.lt.s32.totalorder %s18, 1
      %s289 = scalar_select %p288, %s18, 1
      %p290 = scmp.lt.s32.totalorder %s19, 0
      %s291 = scalar_select %p290, %s19, 0
      %s292 = sadd.s32 %s291, %s289
      %s293 = smul.addr %s292, 8
      %s294 = scalar_lea.vmem %s3, %s293
      // Predicated region
      $region33: #{fwd.1} parent=31 // pred_check
        %p295 = pneg %p121
      $region34: #{fwd.1} parent=31 // pred_check_branch
        %297 = sbr.rel (%p295) target = $region36
      $region35: #{fwd.1} parent=31 // pred_region
        _
      $region36: #{fwd.1} parent=31 // pred_fallthru
        _
    $region32: #{fwd.1} parent=5 // pred_fallthru
      _
    %p298 = scmp.le.s32.totalorder 2, %s9
    // Predicated region
    $region37: #{fwd.1} parent=5 // pred_check
      %p299 = pneg %p298
    $region38: #{fwd.1} parent=5 // pred_check_branch
      %301 = sbr.rel (%p299) target = $region40
    $region39: #{fwd.1} parent=5 // pred_region
      %s302 = ssub.s32 %s9, 2
      // Predicated region
      $region41: #{fwd.1} parent=39 // pred_check
        %p303 = pneg %p127
      $region42: #{fwd.1} parent=39 // pred_check_branch
        %305 = sbr.rel (%p303) target = $region44
      $region43: #{fwd.1} parent=39 // pred_region
        %p306 = scmp.lt.s32.totalorder %s20, 1
        %s307 = scalar_select %p306, %s20, 1
        %p308 = scmp.lt.s32.totalorder %s21, 0
        %s309 = scalar_select %p308, %s21, 0
        %s310 = sadd.s32 %s309, %s307
        %s311 = smul.addr %s310, 8
        %s312 = scalar_lea.vmem %s3, %s311
      $region44: #{fwd.1} parent=39 // pred_fallthru
        _
    $region40: #{fwd.1} parent=5 // pred_fallthru
      _
  $region6: #{fwd.1} parent=0 // loop_footer
    %s13 = sadd.s32 1, %s9
  $region7: #{fwd.1} parent=0 // loop_footer_branch
    %8 = sbr.rel target = $region3
  $region8: #{fwd.1} parent=0 // loop_exit
    _

</llo_original>
